<compile_context>
chip_gen: v7x
topology: tpu7x:2x2x1
jax: 0.10.0
libtpu: 0.0.40
codegen_flags: <defaults>
</compile_context>

<pallas_src>
import math

import jax
import jax.numpy as jnp
from jax.experimental import pallas as pl
from jax.experimental.pallas import tpu as pltpu

_MiB = 1024 * 1024


def _round_up(x, m):
    return -(-x // m) * m


def _mustd_kernel(x_ref, w1x_ref, wtail_ref, b2_ref, o_ref):
    """One (L, TN) column block -> (2, TN) output block.

    x_ref:     (L, TN)  input columns (each column is one (b, d) time series)
    w1x_ref:   (H, L)   stationary first-linear weights (bf16 or f32)
    wtail_ref: (H, 8)   packed [w1_mu | w1_sd | b1 | w2_col0 | w2_col1 | 0..]
    b2_ref:    (2, 1)   second-linear bias
    o_ref:     (2, TN)  lane-dense output block
    """
    x_raw = x_ref[...]
    x = x_raw.astype(jnp.float32)

    # Per-column mean / population std: matches torch
    #   sqrt(var(x, unbiased=False) + 1e-5)
    mean = jnp.mean(x, axis=0, keepdims=True)                    # (1, TN)
    var = jnp.mean((x - mean) ** 2, axis=0, keepdims=True)       # (1, TN)
    std = jnp.sqrt(var + 1e-5)                                   # (1, TN)

    wt = wtail_ref[...]                                          # (H, 8) f32
    w1m, w1s, b1 = wt[:, 0:1], wt[:, 1:2], wt[:, 2:3]
    w2a, w2b = wt[:, 3:4], wt[:, 4:5]

    # Linear(Tin+2 -> H): the [x, mean, std] concat folded into three terms.
    # Only the big term hits the MXU (bf16 operands, f32 accumulation).
    h = jnp.dot(w1x_ref[...], x_raw.astype(w1x_ref.dtype),
                preferred_element_type=jnp.float32)              # (H, TN)
    h = h + w1m * mean + w1s * std + b1
    h = jnp.maximum(h, 0.0)                                      # ReLU

    # Linear(H -> 2) kept OFF the MXU: streaming h (H, TN) through the MXU for
    # only 2 output rows would saturate the MXU feed at large tiles, so do it
    # as 2 VPU multiplies + 2 sublane (XLU) reductions instead.
    out0 = jnp.sum(w2a * h, axis=0, keepdims=True)               # (1, TN)
    out1 = jnp.sum(w2b * h, axis=0, keepdims=True)               # (1, TN)
    out = jnp.concatenate([out0, out1], axis=0) + b2_ref[...]    # (2, TN)
    o_ref[...] = out.astype(o_ref.dtype)


def _pick_tile_n(n, feat_len, hidden, max_tile_lanes):
    """Lane tile (multiple of 128): as large as possible within a VMEM budget.

    Per-step overhead is ~0.35 us, so each step should move >= ~1-2 MiB of x.
    The budget (~40 MiB) keeps the footprint safe on v7x's 64 MiB VMEM/TC.
    """
    n128 = _round_up(max(n, 1), 128)
    # Rough per-lane VMEM bytes: x f32 double-buffered + bf16 dot copy +
    # h f32 + output double-buffered + small temps.
    per_lane = 4 * 2 * feat_len + 2 * feat_len + 4 * hidden + 64
    vmem_cap = max(128, (40 * _MiB // per_lane) // 128 * 128)
    return max(128, min(n128, max_tile_lanes, vmem_cap))


def _pack_params(params, use_bf16_dot):
    """Pre-split/packed constant operands (fetched once, constant index_map)."""
    w1, b1, w2, b2 = params["w1"], params["b1"], params["w2"], params["b2"]
    feat_len = w1.shape[0] - 2          # L
    hidden = w1.shape[1]                # H
    w1x = w1[:feat_len, :].T            # (H, L): stationary MXU operand
    w1x = w1x.astype(jnp.bfloat16 if use_bf16_dot else jnp.float32)
    zeros = jnp.zeros((hidden,), jnp.float32)
    wtail = jnp.stack(
        [w1[feat_len, :], w1[feat_len + 1, :], b1, w2[:, 0], w2[:, 1],
         zeros, zeros, zeros], axis=1).astype(jnp.float32)       # (H, 8)
    b2c = b2.reshape(2, 1).astype(jnp.float32)                   # (2, 1)
    return feat_len, hidden, w1x, wtail, b2c


def _forward_slab(x2d, w1x, wtail, b2c, feat_len, hidden, max_tile_lanes):
    """Run the kernel on one (L, N) slab; returns lane-dense (2, N) f32."""
    n = x2d.shape[1]
    tn = _pick_tile_n(n, feat_len, hidden, max_tile_lanes)
    grid = (pl.cdiv(n, tn),)

    flops = n * (2 * feat_len * hidden + 6 * hidden + 6 * feat_len + 16)
    bytes_accessed = (n * feat_len * x2d.dtype.itemsize + n * 2 * 4
                      + w1x.size * w1x.dtype.itemsize + wtail.size * 4 + 8)

    return pl.pallas_call(
        _mustd_kernel,
        out_shape=jax.ShapeDtypeStruct((2, n), jnp.float32),
        grid_spec=pltpu.PrefetchScalarGridSpec(
            num_scalar_prefetch=0,
            grid=grid,
            in_specs=[
                pl.BlockSpec((feat_len, tn), lambda i: (0, i)),
                pl.BlockSpec((hidden, feat_len), lambda i: (0, 0)),
                pl.BlockSpec((hidden, 8), lambda i: (0, 0)),
                pl.BlockSpec((2, 1), lambda i: (0, 0)),
            ],
            out_specs=pl.BlockSpec((2, tn), lambda i: (0, i)),
        ),
        compiler_params=pltpu.CompilerParams(
            dimension_semantics=("parallel",),
            # Explicit scoped-VMEM budget; < 64 MiB so it is safe on v7x and
            # leaves plenty of headroom on v5e/v6e (128 MiB).
            vmem_limit_bytes=48 * _MiB,
        ),
        cost_estimate=pl.CostEstimate(
            flops=flops, transcendentals=n, bytes_accessed=bytes_accessed),
    )(x2d, w1x, wtail, b2c)


def mustd_model_forward(x_list, params, *, max_tile_lanes=64 * 1024,
                        fuse_below_lanes=16 * 1024, use_bf16_dot=True,
                        lane_dense_output=False):
    """JAX/Pallas equivalent of MuStdModel.forward (separate_projs=False).

    x_list: list of arrays, each of shape (L, B, D) with the same L.
    returns: (sum(B*D), 2) float32 — or (2, sum(B*D)) if lane_dense_output.
    """
    feat_len, hidden, w1x, wtail, b2c = _pack_params(params, use_bf16_dot)

    # Build lane-dense (L, N) slabs (free row-major reshape; col = b*D + d).
    slabs = []
    for x in x_list:
        l, b, d = x.shape
        n = b * d
        if n == 0:                       # covers both B == 0 and D == 0
            continue
        assert l == feat_len, (l, feat_len)
        slabs.append(x.reshape(l, n))
    if not slabs:
        empty = jnp.zeros((0, 2), jnp.float32)
        return empty.T if lane_dense_output else empty

    # Large entries get their own launch (no padding / concat copy of the
    # input); consecutive small entries are fused with a cheap concat so we
    # don't pay per-launch overhead for many tiny slabs.
    groups, cur = [], []
    for s in slabs:
        if s.shape[1] >= fuse_below_lanes:
            if cur:
                groups.append(cur)
                cur = []
            groups.append([s])
        else:
            cur.append(s)
    if cur:
        groups.append(cur)

    outs = []
    for g in groups:
        x2d = g[0] if len(g) == 1 else jnp.concatenate(g, axis=1)
        outs.append(_forward_slab(x2d, w1x, wtail, b2c, feat_len, hidden,
                                  max_tile_lanes))
    out_2n = outs[0] if len(outs) == 1 else jnp.concatenate(outs, axis=1)
    if lane_dense_output:
        return out_2n                    # (2, N), no extra HBM transpose pass
    return out_2n.T                      # reference (N, 2) layout (tiny copy)


def _reference_forward(x_list, params):
    """Plain-JAX reference that mirrors the PyTorch module."""
    w1, b1, w2, b2 = params["w1"], params["b1"], params["w2"], params["b2"]
    outs = []
    for x in x_list:
        l, b, d = x.shape
        if b * d == 0:
            outs.append(jnp.zeros((0, 2), dtype=jnp.float32))
            continue
        mean = jnp.mean(x, axis=0, keepdims=True)
        std = jnp.sqrt(jnp.var(x, axis=0, keepdims=True, ddof=0) + 1e-5)
        xc = jnp.concatenate([x, mean, std], axis=0)          # (L+2, B, D)
        xp = jnp.transpose(xc, (1, 2, 0))                     # (B, D, L+2)
        h = jax.nn.relu(xp @ w1 + b1)                         # (B, D, H)
        o = h @ w2 + b2                                       # (B, D, 2)
        outs.append(o.reshape(-1, 2))
    return jnp.concatenate(outs, axis=0)


def init_params(key, tin, hidden_dim):
    """Deterministic synthetic parameters.

    Note: the PyTorch module zeros all dim>1 params in _reset_parameters; here
    we use small random values so the kernel exercises the full compute path.
    """
    k1, k2, k3, k4 = jax.random.split(key, 4)
    bound1 = 1.0 / math.sqrt(tin + 2)
    bound2 = 1.0 / math.sqrt(hidden_dim)
    return {
        # stored already transposed: (Tin+2, H) and (H, 2)
        "w1": jax.random.uniform(k1, (tin + 2, hidden_dim), jnp.float32,
                                 -bound1, bound1),
        "b1": jax.random.uniform(k2, (hidden_dim,), jnp.float32,
                                 -bound1, bound1),
        "w2": jax.random.uniform(k3, (hidden_dim, 2), jnp.float32,
                                 -bound2, bound2),
        "b2": jax.random.uniform(k4, (2,), jnp.float32, -bound2, bound2),
    }


if __name__ == "__main__":
    # TODO(synk): separate_projs=True (per-datum BatchedLinear proj) not
    # implemented; the default separate_projs=False path is covered.
    Tin = 8          # sequence length L (the linear expects Tin + 2 features)
    hidden = 32
    key = jax.random.PRNGKey(0)
    kp, kx1, kx2, kx3, kx4 = jax.random.split(key, 5)

    params = init_params(kp, Tin, hidden)

    # Case 1: small list (one empty entry), fused into a single launch with a
    # ragged (N=56 < 128) block.
    x_list = [
        jax.random.normal(kx1, (Tin, 2, 16), jnp.float32),   # N = 32
        jax.random.normal(kx2, (Tin, 0, 16), jnp.float32),   # empty (skipped)
        jax.random.normal(kx3, (Tin, 3, 8), jnp.float32),    # N = 24
    ]
    ref = _reference_forward(x_list, params)

    out = jax.block_until_ready(mustd_model_forward(x_list, params))
    assert out.shape == ref.shape == (56, 2), (out.shape, ref.shape)
    assert jnp.allclose(out, ref, atol=5e-2, rtol=5e-2), \
        float(jnp.max(jnp.abs(out - ref)))          # bf16 MXU operands

    out_f32 = jax.block_until_ready(
        mustd_model_forward(x_list, params, use_bf16_dot=False))
    assert jnp.allclose(out_f32, ref, atol=1e-2, rtol=1e-2), \
        float(jnp.max(jnp.abs(out_f32 - ref)))      # f32 MXU operands

    # Case 2: force a multi-step grid with a ragged last block
    # (N = 800 is not a multiple of the 512-lane tile; no zero-pad concat).
    x_list2 = [jax.random.normal(kx4, (Tin, 4, 200), jnp.float32)]
    ref2 = _reference_forward(x_list2, params)
    out2 = jax.block_until_ready(
        mustd_model_forward(x_list2, params, max_tile_lanes=512))
    assert out2.shape == (800, 2), out2.shape
    assert jnp.allclose(out2, ref2, atol=5e-2, rtol=5e-2), \
        float(jnp.max(jnp.abs(out2 - ref2)))

    print("KERNEL_OK")
</pallas_src>

<mosaic_0001>
module attributes {stable_mosaic.version = 11 : i64} {
  func.func @_mustd_kernel(%arg0: i32, %arg1: memref<8x128xf32, #tpu.memory_space<vmem>>, %arg2: memref<32x8xbf16, #tpu.memory_space<vmem>>, %arg3: memref<32x8xf32, #tpu.memory_space<vmem>>, %arg4: memref<2x1xf32, #tpu.memory_space<vmem>>, %arg5: memref<2x128xf32, #tpu.memory_space<vmem>>) attributes {dimension_semantics = [#tpu.dimension_semantics<parallel>], iteration_bounds = array<i64: 1>, scalar_prefetch = 0 : i64, scratch_operands = 0 : i64, tpu.core_type = #tpu.core_type<tc>, window_params = [{transform_indices = @transform_0, window_bounds = array<i64: 8, 128>}, {pipeline_mode = #tpu.pipeline_mode<synchronous>, transform_indices = @transform_1, window_bounds = array<i64: 32, 8>}, {pipeline_mode = #tpu.pipeline_mode<synchronous>, transform_indices = @transform_2, window_bounds = array<i64: 32, 8>}, {pipeline_mode = #tpu.pipeline_mode<synchronous>, transform_indices = @transform_3, window_bounds = array<i64: 2, 1>}, {transform_indices = @transform_4, window_bounds = array<i64: 2, 128>}]} {
    %c0 = arith.constant 0 : index
    %c0_0 = arith.constant 0 : index
    %0 = vector.load %arg1[%c0, %c0_0] : memref<8x128xf32, #tpu.memory_space<vmem>>, vector<8x128xf32>
    %cst = arith.constant dense<0.000000e+00> : vector<128xf32>
    %1 = vector.multi_reduction <add>, %0, %cst [0] : vector<8x128xf32> to vector<128xf32>
    %2 = vector.shape_cast %1 : vector<128xf32> to vector<1x128xf32>
    %cst_1 = arith.constant 8.000000e+00 : f32
    %3 = vector.broadcast %cst_1 : f32 to vector<1x128xf32>
    %4 = arith.divf %2, %3 : vector<1x128xf32>
    %5 = vector.broadcast %4 : vector<1x128xf32> to vector<8x128xf32>
    %6 = arith.subf %0, %5 : vector<8x128xf32>
    %7 = arith.mulf %6, %6 : vector<8x128xf32>
    %cst_2 = arith.constant dense<0.000000e+00> : vector<128xf32>
    %8 = vector.multi_reduction <add>, %7, %cst_2 [0] : vector<8x128xf32> to vector<128xf32>
    %9 = vector.shape_cast %8 : vector<128xf32> to vector<1x128xf32>
    %cst_3 = arith.constant 8.000000e+00 : f32
    %10 = vector.broadcast %cst_3 : f32 to vector<1x128xf32>
    %11 = arith.divf %9, %10 : vector<1x128xf32>
    %cst_4 = arith.constant 9.99999974E-6 : f32
    %12 = vector.broadcast %cst_4 : f32 to vector<1x128xf32>
    %13 = arith.addf %11, %12 : vector<1x128xf32>
    %14 = math.sqrt %13 : vector<1x128xf32>
    %c0_5 = arith.constant 0 : index
    %c0_6 = arith.constant 0 : index
    %15 = vector.load %arg3[%c0_5, %c0_6] : memref<32x8xf32, #tpu.memory_space<vmem>>, vector<32x8xf32>
    %16 = vector.extract_strided_slice %15 {offsets = [0, 0], sizes = [32, 1], strides = [1, 1]} : vector<32x8xf32> to vector<32x1xf32>
    %17 = vector.extract_strided_slice %15 {offsets = [0, 1], sizes = [32, 1], strides = [1, 1]} : vector<32x8xf32> to vector<32x1xf32>
    %18 = vector.extract_strided_slice %15 {offsets = [0, 2], sizes = [32, 1], strides = [1, 1]} : vector<32x8xf32> to vector<32x1xf32>
    %19 = vector.extract_strided_slice %15 {offsets = [0, 3], sizes = [32, 1], strides = [1, 1]} : vector<32x8xf32> to vector<32x1xf32>
    %20 = vector.extract_strided_slice %15 {offsets = [0, 4], sizes = [32, 1], strides = [1, 1]} : vector<32x8xf32> to vector<32x1xf32>
    %c0_7 = arith.constant 0 : index
    %c0_8 = arith.constant 0 : index
    %21 = vector.load %arg2[%c0_7, %c0_8] : memref<32x8xbf16, #tpu.memory_space<vmem>>, vector<32x8xbf16>
    %22 = arith.truncf %0 : vector<8x128xf32> to vector<8x128xbf16>
    %cst_9 = arith.constant dense<0.000000e+00> : vector<32x128xf32>
    %23 = tpu.matmul %21, %22, %cst_9 {dimension_numbers = #tpu.dot_dimension_numbers<[1], [0], [0], [1], [0, 0, 1, 1], [], []>} : vector<32x8xbf16>, vector<8x128xbf16>, vector<32x128xf32> -> vector<32x128xf32>
    %24 = vector.broadcast %16 : vector<32x1xf32> to vector<32x128xf32>
    %25 = vector.broadcast %4 : vector<1x128xf32> to vector<32x128xf32>
    %26 = arith.mulf %24, %25 : vector<32x128xf32>
    %27 = arith.addf %23, %26 : vector<32x128xf32>
    %28 = vector.broadcast %17 : vector<32x1xf32> to vector<32x128xf32>
    %29 = vector.broadcast %14 : vector<1x128xf32> to vector<32x128xf32>
    %30 = arith.mulf %28, %29 : vector<32x128xf32>
    %31 = arith.addf %27, %30 : vector<32x128xf32>
    %32 = vector.broadcast %18 : vector<32x1xf32> to vector<32x128xf32>
    %33 = arith.addf %31, %32 : vector<32x128xf32>
    %cst_10 = arith.constant 0.000000e+00 : f32
    %34 = vector.broadcast %cst_10 : f32 to vector<32x128xf32>
    %35 = arith.maximumf %33, %34 : vector<32x128xf32>
    %36 = vector.broadcast %19 : vector<32x1xf32> to vector<32x128xf32>
    %37 = arith.mulf %36, %35 : vector<32x128xf32>
    %cst_11 = arith.constant dense<0.000000e+00> : vector<128xf32>
    %38 = vector.multi_reduction <add>, %37, %cst_11 [0] : vector<32x128xf32> to vector<128xf32>
    %39 = vector.shape_cast %38 : vector<128xf32> to vector<1x128xf32>
    %40 = vector.broadcast %20 : vector<32x1xf32> to vector<32x128xf32>
    %41 = arith.mulf %40, %35 : vector<32x128xf32>
    %cst_12 = arith.constant dense<0.000000e+00> : vector<128xf32>
    %42 = vector.multi_reduction <add>, %41, %cst_12 [0] : vector<32x128xf32> to vector<128xf32>
    %43 = vector.shape_cast %42 : vector<128xf32> to vector<1x128xf32>
    %44 = tpu.concatenate %39, %43 in 0 : vector<1x128xf32>, vector<1x128xf32> -> vector<2x128xf32>
    %c0_13 = arith.constant 0 : index
    %c0_14 = arith.constant 0 : index
    %45 = vector.load %arg4[%c0_13, %c0_14] : memref<2x1xf32, #tpu.memory_space<vmem>>, vector<2x1xf32>
    %46 = vector.broadcast %45 : vector<2x1xf32> to vector<2x128xf32>
    %47 = arith.addf %44, %46 : vector<2x128xf32>
    %c0_15 = arith.constant 0 : index
    %c0_16 = arith.constant 0 : index
    %48 = vector.load %arg5[%c0_15, %c0_16] : memref<2x128xf32, #tpu.memory_space<vmem>>, vector<2x128xf32>
    tpu.vector_store %arg5[%c0_15, %c0_16], %47 {strides = array<i32>} : memref<2x128xf32, #tpu.memory_space<vmem>>, vector<2x128xf32>,
    return
  }
  func.func @transform_0(%arg0: i32) -> (i32, i32) {
    %c0_i32 = arith.constant 0 : i32
    %c0_i32_0 = arith.constant 0 : i32
    return %c0_i32, %arg0 : i32, i32
  }
  func.func @transform_1(%arg0: i32) -> (i32, i32) {
    %c0_i32 = arith.constant 0 : i32
    %c0_i32_0 = arith.constant 0 : i32
    %c0_i32_1 = arith.constant 0 : i32
    return %c0_i32, %c0_i32_0 : i32, i32
  }
  func.func @transform_2(%arg0: i32) -> (i32, i32) {
    %c0_i32 = arith.constant 0 : i32
    %c0_i32_0 = arith.constant 0 : i32
    %c0_i32_1 = arith.constant 0 : i32
    return %c0_i32, %c0_i32_0 : i32, i32
  }
  func.func @transform_3(%arg0: i32) -> (i32, i32) {
    %c0_i32 = arith.constant 0 : i32
    %c0_i32_0 = arith.constant 0 : i32
    %c0_i32_1 = arith.constant 0 : i32
    return %c0_i32, %c0_i32_0 : i32, i32
  }
  func.func @transform_4(%arg0: i32) -> (i32, i32) {
    %c0_i32 = arith.constant 0 : i32
    %c0_i32_0 = arith.constant 0 : i32
    return %c0_i32, %arg0 : i32, i32
  }
}

</mosaic_0001>

<llo_original>
// kernel: tpu_custom_call.1
$region0: #{tpu_custom_call.1}
  #allocation0 [shape = 'u32[]', space=smem, size = 0x4, offset = 0x4, fixed_abs, tag = 'smem constant byte address 0x4 - core index']
  #allocation1 [shape = 'u32[144,128]{1,0:T(1,128)}', space=vmem, size = 0x12000, scoped, tag = 'internal scratch']
  %s0 = inlined_call_operand.vmem [shape: f32[8,56], index: 0, kind: input, shape index: {}]
  %s1 = inlined_call_operand.vmem [shape: bf16[32,8], index: 1, kind: input, shape index: {}]
  %s2 = inlined_call_operand.vmem [shape: f32[32,8], index: 2, kind: input, shape index: {}]
  %s3 = inlined_call_operand.vmem [shape: f32[2,1], index: 3, kind: input, shape index: {}]
  %s4 = inlined_call_operand.hbm [shape: f32[2,56], index: 4, kind: output, shape index: {}]
  %s5 = sld [smem:[#allocation0]]
  $region26: #{tpu_custom_call.1} parent=0
    _
  %s7 = ssub.s32 1, %s5
  %s8 = scalar_select 0, %s7, %s5
  $region1: #{tpu_custom_call.1} parent=0
    #allocation2 [shape = 'u8[1024]{0}', space=vmem, size = 0x400, scoped, tag = 'output window, operand 0, single buffered']
    #allocation3 [shape = 's32[1]{0}', space=sflag, size = 0x4, scoped, tag = 'scoped memory for tpu_custom_call.1']
    %9 = vsyncpa [#allocation3], 0
    // Predicated region
    $region2: #{tpu_custom_call.1} parent=1 // pred_check
      _
    $region3: #{tpu_custom_call.1} parent=1 // pred_check_branch
      %11 = sbr.rel (0) target = $region5
    $region4: #{tpu_custom_call.1} parent=1 // pred_region
      _
    $region5: #{tpu_custom_call.1} parent=1 // pred_fallthru
      _
    // Predicated region
    $region6: #{tpu_custom_call.1} parent=1 // pred_check
      _
    $region7: #{tpu_custom_call.1} parent=1 // pred_check_branch
      %13 = sbr.rel (0) target = $region9
    $region8: #{tpu_custom_call.1} parent=1 // pred_region
      _
    $region9: #{tpu_custom_call.1} parent=1 // pred_fallthru
      _
    // Predicated region
    $region10: #{tpu_custom_call.1} parent=1 // pred_check
      _
    $region11: #{tpu_custom_call.1} parent=1 // pred_check_branch
      %15 = sbr.rel (0) target = $region13
    $region12: #{tpu_custom_call.1} parent=1 // pred_region
      _
    $region13: #{tpu_custom_call.1} parent=1 // pred_fallthru
      _
    // Predicated region
    $region14: #{tpu_custom_call.1} parent=1 // pred_check
      _
    $region15: #{tpu_custom_call.1} parent=1 // pred_check_branch
      %17 = sbr.rel (0) target = $region17
    $region16: #{tpu_custom_call.1} parent=1 // pred_region
      _
    $region17: #{tpu_custom_call.1} parent=1 // pred_fallthru
      _
    %v19 = vld [vmem:[%s0] sm:$0xff]
    %v20 = vrot.slane %v19, 4
    %v21 = vadd.f32 %v19, %v20
    %v22 = vrot.slane %v21, 2
    %v23 = vadd.f32 %v21, %v22
    %v24 = vrot.slane %v23, 1
    %v25 = vadd.f32 %v23, %v24
    %v26 = vrcp.pop 8.0
    %v27 = vmul.f32 %v25, %v26
    %v28 = vsub.f32 %v19, %v27
    %v29 = vmul.f32 %v28, %v28
    %v30 = vrot.slane %v29, 4
    %v31 = vadd.f32 %v29, %v30
    %v32 = vrot.slane %v31, 2
    %v33 = vadd.f32 %v31, %v32
    %v34 = vrot.slane %v33, 1
    %v35 = vadd.f32 %v33, %v34
    %v36 = vmul.f32 %v35, %v26
    %v37 = vadd.f32 %v36, 1e-05
    %v38 = vrsqrt.pop %v37
    %v39 = vmul.f32 %v37, %v38
    %vm40 = vcmp.eq.f32.partialorder %v37, inf
    %v41 = vsel %vm40, %v37, %v39
    %vm42 = vcmp.eq.f32.partialorder %v37, 0.0
    %v43 = vand.u32 %v37, 2147483648
    %v44 = vsel %vm42, %v43, %v41
    %v45 = vld [vmem:[%s2] sm:$0xff]
    %v46 = vld [vmem:[%s2 + $0x8] sm:$0xff]
    %v47 = vld [vmem:[%s2 + $0x10] sm:$0xff]
    %v48 = vld [vmem:[%s2 + $0x18] sm:$0xff]
    %v49 = vld [vmem:[%s1] sm:$0xf]
    %v50 = vld [vmem:[%s1 + $0x4] sm:$0xf]
    %v51 = vld [vmem:[%s1 + $0x8] sm:$0xf]
    %v52 = vld [vmem:[%s1 + $0xc] sm:$0xf]
    %v53 = vpack.c.bf16 %v19, %v19
    %55 = vset.pattern.permute.xlu0 0
    %56 = vperm.xlu0 %55, %v45
    %v57 = vpop.permute.xlu0 %56
    %60 = vset.pattern.permute.xlu0 0
    %61 = vperm.xlu0 %60, %v46
    %v62 = vpop.permute.xlu0 %61
    %65 = vset.pattern.permute.xlu0 0
    %66 = vperm.xlu0 %65, %v47
    %v67 = vpop.permute.xlu0 %66
    %70 = vset.pattern.permute.xlu0 0
    %71 = vperm.xlu0 %70, %v48
    %v72 = vpop.permute.xlu0 %71
    %v74 = vmul.f32 %v57, %v27
    %v75 = vmul.f32 %v62, %v27
    %v76 = vmul.f32 %v67, %v27
    %v77 = vmul.f32 %v72, %v27
    %v82 = vunpack.c.l.b16 %v49
    %v83 = vunpack.c.l.b16 %v50
    %v84 = vunpack.c.l.b16 %v51
    %v85 = vunpack.c.l.b16 %v52
    %v86 = vpack.c.b16 %v83, %v82
    %v87 = vpack.c.b16 %v85, %v84
    %vm88 = vcmask 64512
    %v90 = vsel %vm88, %v86, 0
    %v93 = vsel %vm88, %v87, 0
    %vm95 = vcmask 1043456
    %v97 = vsel %vm95, %v53, 0
    %99 = vmatprep.subr.bf16.mxu0 0
    %100 = vmatpush1.bf16.msra.mxu0 %v97
    %101 = vmatprep.subr.bf16.mxu0 0
    %102 = vmatpush1.bf16.msra.mxu0 0
    %103 = vmatprep.subr.bf16.mxu0 0
    %104 = vmatpush1.bf16.msra.mxu0 0
    %105 = vmatprep.subr.bf16.mxu0 0
    %106 = vmatpush1.bf16.msra.mxu0 0
    %107 = vmatprep.subr.bf16.mxu0 0
    %108 = vmatpush1.bf16.msra.mxu0 0
    %109 = vmatprep.subr.bf16.mxu0 0
    %110 = vmatpush1.bf16.msra.mxu0 0
    %111 = vmatprep.subr.bf16.mxu0 0
    %112 = vmatpush1.bf16.msra.mxu0 0
    %113 = vmatprep.subr.bf16.mxu0 0
    %114 = vmatpush1.bf16.msra.mxu0 0
    %115 = vmatprep.subr.bf16.mxu0 0
    %116 = vmatpush1.bf16.msra.mxu0 0
    %117 = vmatprep.subr.bf16.mxu0 0
    %118 = vmatpush1.bf16.msra.mxu0 0
    %119 = vmatprep.subr.bf16.mxu0 0
    %120 = vmatpush1.bf16.msra.mxu0 0
    %121 = vmatprep.subr.bf16.mxu0 0
    %122 = vmatpush1.bf16.msra.mxu0 0
    %123 = vmatprep.subr.bf16.mxu0 0
    %124 = vmatpush1.bf16.msra.mxu0 0
    %125 = vmatprep.subr.bf16.mxu0 0
    %126 = vmatpush1.bf16.msra.mxu0 0
    %127 = vmatprep.subr.bf16.mxu0 0
    %128 = vmatpush1.bf16.msra.mxu0 0
    %129 = vmatprep.subr.bf16.mxu0 0
    %130 = vmatpush1.bf16.msra.mxu0 0
    %131 = vmatprep.mubr.bf16.mxu0 0
    %132 = vmatmul.mubr.bf16.gmra.mrb[0].mxu0 %v90
    %v133 = vpop.f32.mrb[0].mxu0
    %v134 = vadd.f32 %v74, %v133
    %v135 = vpop.f32.mrb[0].mxu0
    %v136 = vpop.f32.mrb[0].mxu0
    %v137 = vadd.f32 %v75, %v136
    %v138 = vpop.f32.mrb[0].mxu0
    %139 = vmatprep.mubr.bf16.mxu0 0
    %140 = vmatmul.mubr.bf16.gmra.mrb[0].mxu0 %v93
    %v141 = vpop.f32.mrb[0].mxu0
    %v142 = vadd.f32 %v76, %v141
    %v143 = vpop.f32.mrb[0].mxu0
    %v144 = vpop.f32.mrb[0].mxu0
    %v145 = vadd.f32 %v77, %v144
    %v146 = vpop.f32.mrb[0].mxu0
    %147 = vdwg.mxu0
    %148 = vset.pattern.permute.xlu0 1
    %149 = vperm.xlu0 %148, %v45
    %v150 = vpop.permute.xlu0 %149
    %152 = vset.pattern.permute.xlu0 1
    %153 = vperm.xlu0 %152, %v46
    %v154 = vpop.permute.xlu0 %153
    %156 = vset.pattern.permute.xlu0 1
    %157 = vperm.xlu0 %156, %v47
    %v158 = vpop.permute.xlu0 %157
    %160 = vset.pattern.permute.xlu0 1
    %161 = vperm.xlu0 %160, %v48
    %v162 = vpop.permute.xlu0 %161
    %v164 = vmul.f32 %v150, %v44
    %v165 = vmul.f32 %v154, %v44
    %v166 = vmul.f32 %v158, %v44
    %v167 = vmul.f32 %v162, %v44
    %v168 = vadd.f32 %v134, %v164
    %v169 = vadd.f32 %v137, %v165
    %v170 = vadd.f32 %v142, %v166
    %v171 = vadd.f32 %v145, %v167
    %172 = vset.pattern.permute.xlu0 2
    %173 = vperm.xlu0 %172, %v45
    %v174 = vpop.permute.xlu0 %173
    %176 = vset.pattern.permute.xlu0 2
    %177 = vperm.xlu0 %176, %v46
    %v178 = vpop.permute.xlu0 %177
    %180 = vset.pattern.permute.xlu0 2
    %181 = vperm.xlu0 %180, %v47
    %v182 = vpop.permute.xlu0 %181
    %184 = vset.pattern.permute.xlu0 2
    %185 = vperm.xlu0 %184, %v48
    %v186 = vpop.permute.xlu0 %185
    %v188 = vadd.f32 %v168, %v174
    %v189 = vadd.f32 %v169, %v178
    %v190 = vadd.f32 %v170, %v182
    %v191 = vadd.f32 %v171, %v186
    %v192 = vmax.f32 %v188, 0.0
    %v193 = vmax.f32 %v189, 0.0
    %v194 = vmax.f32 %v190, 0.0
    %v195 = vmax.f32 %v191, 0.0
    %196 = vset.pattern.permute.xlu0 3
    %197 = vperm.xlu0 %196, %v45
    %v198 = vpop.permute.xlu0 %197
    %200 = vset.pattern.permute.xlu0 3
    %201 = vperm.xlu0 %200, %v46
    %v202 = vpop.permute.xlu0 %201
    %204 = vset.pattern.permute.xlu0 3
    %205 = vperm.xlu0 %204, %v47
    %v206 = vpop.permute.xlu0 %205
    %208 = vset.pattern.permute.xlu0 3
    %209 = vperm.xlu0 %208, %v48
    %v210 = vpop.permute.xlu0 %209
    %v212 = vmul.f32 %v198, %v192
    %v213 = vmul.f32 %v202, %v193
    %v214 = vmul.f32 %v206, %v194
    %v215 = vmul.f32 %v210, %v195
    %v216 = vadd.f32 %v212, %v213
    %v217 = vadd.f32 %v216, %v214
    %v218 = vadd.f32 %v217, %v215
    %v219 = vrot.slane %v218, 4
    %v220 = vadd.f32 %v218, %v219
    %v221 = vrot.slane %v220, 2
    %v222 = vadd.f32 %v220, %v221
    %v223 = vrot.slane %v222, 1
    %v224 = vadd.f32 %v222, %v223
    %225 = vset.pattern.permute.xlu0 4
    %226 = vperm.xlu0 %225, %v45
    %v227 = vpop.permute.xlu0 %226
    %229 = vset.pattern.permute.xlu0 4
    %230 = vperm.xlu0 %229, %v46
    %v231 = vpop.permute.xlu0 %230
    %233 = vset.pattern.permute.xlu0 4
    %234 = vperm.xlu0 %233, %v47
    %v235 = vpop.permute.xlu0 %234
    %237 = vset.pattern.permute.xlu0 4
    %238 = vperm.xlu0 %237, %v48
    %v239 = vpop.permute.xlu0 %238
    %v241 = vmul.f32 %v227, %v192
    %v242 = vmul.f32 %v231, %v193
    %v243 = vmul.f32 %v235, %v194
    %v244 = vmul.f32 %v239, %v195
    %v245 = vadd.f32 %v241, %v242
    %v246 = vadd.f32 %v245, %v243
    %v247 = vadd.f32 %v246, %v244
    %v248 = vrot.slane %v247, 4
    %v249 = vadd.f32 %v247, %v248
    %v250 = vrot.slane %v249, 2
    %v251 = vadd.f32 %v249, %v250
    %v252 = vrot.slane %v251, 1
    %v253 = vadd.f32 %v251, %v252
    %vm254 = vcmask 1040384
    %v255 = vsel %vm254, %v224, %v253
    %v256 = vld [vmem:[%s3] sm:$0x3]
    %258 = vset.pattern.permute.xlu0 0
    %259 = vperm.xlu0 %258, %v256
    %v260 = vpop.permute.xlu0 %259
    %v262 = vadd.f32 %v255, %v260
    %263 = vst [vmem:[#allocation2] sm:$0x3] %v262
    // Predicated region
    $region18: #{tpu_custom_call.1} parent=1 // pred_check
      _
    $region19: #{tpu_custom_call.1} parent=1 // pred_check_branch
      %265 = sbr.rel (0) target = $region21
    $region20: #{tpu_custom_call.1} parent=1 // pred_region
      %s267 = ssub.s32 32, 32
      %268 = vsyncadd [#allocation3], %s267
      %s270 = sshll.u32 [#allocation2], 4
      %s271 = int_to_ptr.vmem [resolvable:$true] %s270
      %273 = dma.vmem_to_hbm [thread:$0]  %s271, 32, %s4, [#allocation3]
    $region21: #{tpu_custom_call.1} parent=1 // pred_fallthru
      _
    // Predicated region
    $region22: #{tpu_custom_call.1} parent=1 // pred_check
      _
    $region23: #{tpu_custom_call.1} parent=1 // pred_check_branch
      %275 = sbr.rel (0) target = $region25
    $region24: #{tpu_custom_call.1} parent=1 // pred_region
      %276 = dma.done [#allocation3], 32
    $region25: #{tpu_custom_call.1} parent=1 // pred_fallthru
      _
    %277 = vsyncpa [#allocation3], 1

</llo_original>
